<compile_context>
chip_gen: v7x
topology: tpu7x:2x2x1
jax: 0.10.0
libtpu: 0.0.40
codegen_flags: <defaults>
</compile_context>

<pallas_src>
import math
from functools import partial

import numpy as np
import jax
import jax.numpy as jnp
from jax import lax
from jax.experimental import pallas as pl
from jax.experimental.pallas import tpu as pltpu


_LANE = 128


def _build_avg_weights(seq_len, kernel_size, stride, front_pad, l_out):
    """Constant (l_out, seq_len) banded averaging matrix with the replicate
    padding folded in: out = W @ x  reproduces pad+AvgPool1d exactly."""
    taps = np.arange(l_out)[:, None] * stride + np.arange(kernel_size)[None, :]
    src = np.clip(taps - front_pad, 0, seq_len - 1)            # (l_out, k)
    w = np.zeros((l_out, seq_len), dtype=np.float32)
    rows = np.repeat(np.arange(l_out), kernel_size)
    np.add.at(w, (rows, src.ravel()), np.float32(1.0 / kernel_size))
    return w


def _choose_lane_tile(c, b, l, l_out, itemsize):
    """Lane-tile for the channel axis. Only tile when C is a multiple of 128
    (so no HBM padding copy is ever needed); otherwise use the full dim."""
    if c % _LANE != 0 or c == _LANE:
        return c
    budget = 4 * 1024 * 1024          # f32 bytes for one in+out block
    cap = 2048                        # raised from 512 per perf feedback
    best = _LANE
    t = _LANE
    while t <= min(c, cap):
        if c % t == 0:
            if (l + l_out) * t * max(itemsize, 4) > budget:
                break
            if not (b == 1 and t == c):   # keep >=2 grid steps (v7x, 2 TCs)
                best = t
        t += _LANE
    return best


def _moving_avg_kernel(w_ref, x_ref, o_ref):
    """out_block = W @ x_block on the MXU.

    w_ref: (l_out, l)        f32, resident across grid steps
    x_ref: (l, lane_tile)    input block (native layout, batch squeezed)
    o_ref: (l_out, lane_tile)
    """
    x = x_ref[...].astype(jnp.float32)
    l, c = x.shape
    c_up = -(-c // _LANE) * _LANE
    if c_up != c:
        # Widen to a lane-aligned RHS in vregs (no HBM padding copy).
        x = jnp.concatenate([x, jnp.zeros((l, c_up - c), jnp.float32)], axis=-1)
    y = jnp.dot(w_ref[...], x,
                preferred_element_type=jnp.float32,
                precision=jax.lax.Precision.HIGHEST)
    if c_up != c:
        y = y[:, :c]
    o_ref[...] = y.astype(o_ref.dtype)


def moving_avg_forward(x, kernel_size, stride):
    """JAX/Pallas equivalent of moving_avg(kernel_size, stride).forward(x)."""
    if x.ndim == 2:
        x = x[..., None]
    b, l, c = x.shape

    front_pad = kernel_size - 1 - math.floor((kernel_size - 1) // 2)
    l_pad = l + kernel_size - 1
    l_out = (l_pad - kernel_size) // stride + 1

    # TODO(synk): for very long sequences (L >> 1k) the (l_out, L) weight grows
    # quadratically; add L tiling with a kernel_size-1 halo before using there.
    w = jnp.asarray(_build_avg_weights(l, kernel_size, stride, front_pad, l_out))

    itemsize = x.dtype.itemsize
    lane_tile = _choose_lane_tile(c, b, l, l_out, itemsize)
    c_tiles = c // lane_tile

    w_bytes = l_out * l * 4
    blk_bytes = (l + l_out) * lane_tile * max(itemsize, 4)
    vmem_est = 2 * (w_bytes + blk_bytes) + (2 << 20)
    vmem_limit = int(min(64 * 2 ** 20, max(4 * vmem_est, 32 * 2 ** 20)))

    cost = pl.CostEstimate(
        flops=int(2 * b * l_out * l * c),
        transcendentals=0,
        bytes_accessed=int(x.size * itemsize + b * l_out * c * itemsize
                           + w.size * 4),
    )

    out = pl.pallas_call(
        _moving_avg_kernel,
        out_shape=jax.ShapeDtypeStruct((b, l_out, c), x.dtype),
        grid_spec=pltpu.PrefetchScalarGridSpec(
            num_scalar_prefetch=0,
            grid=(b, c_tiles),
            in_specs=[
                # Constant block index -> W is fetched once and stays resident.
                pl.BlockSpec((l_out, l), lambda bi, ci: (0, 0)),
                pl.BlockSpec((None, l, lane_tile), lambda bi, ci: (bi, 0, ci)),
            ],
            out_specs=pl.BlockSpec((None, l_out, lane_tile),
                                   lambda bi, ci: (bi, 0, ci)),
        ),
        compiler_params=pltpu.CompilerParams(
            dimension_semantics=("parallel", "parallel"),
            vmem_limit_bytes=vmem_limit,
        ),
        cost_estimate=cost,
    )(w, x)
    # TODO(synk): when used inside SeriesDecomp (res = x - mean), emit the
    # residual as a second output of the same pallas_call to save HBM traffic.
    return out


def _reference_moving_avg(x, kernel_size, stride):
    """Pure-JAX reference mirroring the PyTorch forward exactly."""
    if x.ndim == 2:
        x = x[..., None]
    front_pad = kernel_size - 1 - math.floor((kernel_size - 1) // 2)
    end_pad = math.floor((kernel_size - 1) // 2)
    front = jnp.repeat(x[:, 0:1, :], front_pad, axis=1)
    end = jnp.repeat(x[:, -1:, :], end_pad, axis=1)
    xp = jnp.concatenate([front, x, end], axis=1)
    l_pad = xp.shape[1]
    l_out = (l_pad - kernel_size) // stride + 1
    windows = jnp.stack(
        [xp[:, k: k + (l_out - 1) * stride + 1: stride, :]
         for k in range(kernel_size)],
        axis=0)
    return jnp.mean(windows, axis=0)


if __name__ == "__main__":
    key = jax.random.PRNGKey(0)

    configs = [
        # (B, L, C, kernel_size, stride)
        (2, 16, 8, 5, 1),      # small channel count, native layout
        (2, 16, 8, 4, 1),      # even kernel_size (asymmetric replicate pad)
        (4, 96, 7, 25, 1),     # Autoformer-style series decomposition sizes
        (2, 16, 128, 5, 1),    # lane-aligned channel count
        (2, 24, 256, 7, 1),    # C multiple of 128 (channel tiling path)
        (2, 32, 8, 5, 2),      # stride > 1 (folded into the weight matrix)
    ]
    for i, (B, L, C, ks, st) in enumerate(configs):
        k = jax.random.fold_in(key, i)
        x = jax.random.normal(k, (B, L, C), dtype=jnp.float32)
        out = jax.block_until_ready(moving_avg_forward(x, ks, st))
        ref = _reference_moving_avg(x, ks, st)
        assert out.shape == ref.shape, (out.shape, ref.shape)
        assert jnp.allclose(out, ref, atol=1e-5, rtol=1e-5), \
            f"mismatch vs reference for config {(B, L, C, ks, st)}"

    # 2-D input path (B, L): the module unsqueezes a channel dim.
    x2 = jax.random.normal(jax.random.fold_in(key, 99), (3, 16), dtype=jnp.float32)
    out2 = jax.block_until_ready(moving_avg_forward(x2, 5, 1))
    ref2 = _reference_moving_avg(x2, 5, 1)
    assert out2.shape == ref2.shape
    assert jnp.allclose(out2, ref2, atol=1e-5, rtol=1e-5), "mismatch (2-D input)"

    print("KERNEL_OK")
</pallas_src>

<mosaic_0001>
module attributes {stable_mosaic.version = 11 : i64} {
  func.func @_moving_avg_kernel(%arg0: i32, %arg1: i32, %arg2: memref<16x16xf32, #tpu.memory_space<vmem>>, %arg3: memref<1x16x8xf32, #tpu.memory_space<vmem>>, %arg4: memref<1x16x8xf32, #tpu.memory_space<vmem>>) attributes {dimension_semantics = [#tpu.dimension_semantics<parallel>, #tpu.dimension_semantics<parallel>], iteration_bounds = array<i64: 2, 1>, scalar_prefetch = 0 : i64, scratch_operands = 0 : i64, tpu.core_type = #tpu.core_type<tc>, window_params = [{pipeline_mode = #tpu.pipeline_mode<synchronous>, transform_indices = @transform_0, window_bounds = array<i64: 16, 16>}, {transform_indices = @transform_1, window_bounds = array<i64: 1, 16, 8>}, {transform_indices = @transform_2, window_bounds = array<i64: 1, 16, 8>}]} {
    %c0 = arith.constant 0 : index
    %c0_0 = arith.constant 0 : index
    %c0_1 = arith.constant 0 : index
    %0 = vector.load %arg3[%c0, %c0_0, %c0_1] : memref<1x16x8xf32, #tpu.memory_space<vmem>>, vector<1x16x8xf32>
    %1 = vector.shape_cast %0 : vector<1x16x8xf32> to vector<16x8xf32>
    %cst = arith.constant 0.000000e+00 : f32
    %2 = vector.broadcast %cst : f32 to vector<16x120xf32>
    %3 = tpu.concatenate %1, %2 in 1 : vector<16x8xf32>, vector<16x120xf32> -> vector<16x128xf32>
    %c0_2 = arith.constant 0 : index
    %c0_3 = arith.constant 0 : index
    %4 = vector.load %arg2[%c0_2, %c0_3] : memref<16x16xf32, #tpu.memory_space<vmem>>, vector<16x16xf32>
    %cst_4 = arith.constant dense<0.000000e+00> : vector<16x128xf32>
    %5 = tpu.matmul %4, %3, %cst_4 {dimension_numbers = #tpu.dot_dimension_numbers<[1], [0], [0], [1], [0, 0, 1, 1], [], []>, precision = #tpu.contract_precision<fp32>} : vector<16x16xf32>, vector<16x128xf32>, vector<16x128xf32> -> vector<16x128xf32>
    %6 = vector.extract_strided_slice %5 {offsets = [0, 0], sizes = [16, 8], strides = [1, 1]} : vector<16x128xf32> to vector<16x8xf32>
    %c0_5 = arith.constant 0 : index
    %c0_6 = arith.constant 0 : index
    %c0_7 = arith.constant 0 : index
    %7 = vector.load %arg4[%c0_5, %c0_6, %c0_7] : memref<1x16x8xf32, #tpu.memory_space<vmem>>, vector<1x16x8xf32>
    %8 = vector.shape_cast %7 : vector<1x16x8xf32> to vector<16x8xf32>
    %9 = vector.shape_cast %6 : vector<16x8xf32> to vector<1x16x8xf32>
    tpu.vector_store %arg4[%c0_5, %c0_6, %c0_7], %9 {strides = array<i32>} : memref<1x16x8xf32, #tpu.memory_space<vmem>>, vector<1x16x8xf32>,
    return
  }
  func.func @transform_0(%arg0: i32, %arg1: i32) -> (i32, i32) {
    %c0_i32 = arith.constant 0 : i32
    %c0_i32_0 = arith.constant 0 : i32
    %c0_i32_1 = arith.constant 0 : i32
    return %c0_i32, %c0_i32_0 : i32, i32
  }
  func.func @transform_1(%arg0: i32, %arg1: i32) -> (i32, i32, i32) {
    %c0_i32 = arith.constant 0 : i32
    %c0_i32_0 = arith.constant 0 : i32
    return %arg0, %c0_i32, %arg1 : i32, i32, i32
  }
  func.func @transform_2(%arg0: i32, %arg1: i32) -> (i32, i32, i32) {
    %c0_i32 = arith.constant 0 : i32
    %c0_i32_0 = arith.constant 0 : i32
    return %arg0, %c0_i32, %arg1 : i32, i32, i32
  }
}

</mosaic_0001>

<llo_original>
// kernel: tpu_custom_call.1
$region0: #{tpu_custom_call.1}
  #allocation0 [shape = 'u32[]', space=smem, size = 0x4, offset = 0x4, fixed_abs, tag = 'smem constant byte address 0x4 - core index']
  #allocation1 [shape = 'u32[144,128]{1,0:T(1,128)}', space=vmem, size = 0x12000, scoped, tag = 'internal scratch']
  %s0 = inlined_call_operand.vmem [shape: f32[16,16], index: 0, kind: input, shape index: {}]
  %s1 = inlined_call_operand.vmem [shape: f32[2,16,8], index: 1, kind: input, shape index: {}]
  %s2 = inlined_call_operand.vmem [shape: f32[2,16,8], index: 2, kind: output, shape index: {}]
  %s3 = sld [smem:[#allocation0]]
  $region41: #{tpu_custom_call.1} parent=0
    _
  %s5 = ssub.s32 1, %s3
  %s6 = scalar_select 0, %s5, %s3
  loop: start=0, step=1, limit=4
  $region2: #{tpu_custom_call.1} parent=0 // loop_pre_header
    _
  $region3: #{tpu_custom_call.1} parent=0 // loop_header
    %s8 = sphi 0, %s12
    %p9 = scmp.ge.s32.totalorder %s8, 4
    %s15 = sphi 0, %s27
    %s16 = sphi 0, %s23
    %s17 = sphi 0, %s15
    %s18 = sphi 0, %s16
    %s19 = sphi 0, %s17
    %s20 = sphi 0, %s18
    %s28 = sphi 0, %s28
    %s30 = sphi 0, %s28
    %s31 = sphi 0, %s30
    %s45 = sphi 0, %s31
    %s53 = sphi 0, %s55
    %s56 = sphi 0, %s53
    %s57 = sphi 0, %s56
    %s73 = sphi 0, %s57
    %s81 = sphi 0, %s83
    %s84 = sphi 0, %s81
    %s85 = sphi 0, %s84
    %s101 = sphi 0, %s85
  $region4: #{tpu_custom_call.1} parent=0 // loop_header_branch
    %11 = sbr.rel (%p9) target = $region8
  $region5: #{tpu_custom_call.1} parent=0 // loop_body
    %s13 = ssub.s32 %s8, 1
    %s14 = ssub.s32 %s8, 2
    %s21 = sadd.s32 1, %s16
    %p22 = scmp.ge.s32.totalorder %s21, 1
    %s23 = scalar_select %p22, 0, %s21
    %s24 = sadd.s32 1, %s15
    %s25 = scalar_select %p22, %s24, %s15
    %p26 = scmp.ge.s32.totalorder %s25, 2
    %s27 = scalar_select %p26, 0, %s25
    %s29 = sadd.s32 %s28, 1
    %p32 = scmp.eq.s32.totalorder %s8, 1
    %p33 = scmp.ne.s32.totalorder %s28, %s30
    %p34 = scmp.eq.s32.totalorder %s8, 0
    %p35 = por %p33, %p34
    %p36 = scmp.ne.s32.totalorder %s28, %s30
    %p37 = scmp.eq.s32.totalorder %s13, 1
    %p38 = por %p36, %p37
    %p39 = scmp.ne.s32.totalorder %s30, %s31
    %p40 = scmp.eq.s32.totalorder %s13, 0
    %p41 = por %p39, %p40
    %p42 = scmp.ne.s32.totalorder %s30, %s31
    %p43 = scmp.eq.s32.totalorder %s14, 1
    %p44 = por %p42, %p43
    %p46 = scmp.ne.s32.totalorder %s31, %s45
    %p47 = scmp.eq.s32.totalorder %s14, 0
    %p48 = por %p46, %p47
    %s49 = ssub.s32 %s15, %s27
    %s50 = ssub.s32 %s16, %s23
    %s51 = sor.u32 %s49, %s50
    %p52 = scmp.eq.s32.totalorder %s51, 0
    %s54 = sadd.s32 %s53, 1
    %s55 = scalar_select %p52, %s53, %s54
    %p58 = pneg %p52
    %p59 = scmp.eq.s32.totalorder %s8, 1
    %p60 = por %p58, %p59
    %p61 = scmp.ne.s32.totalorder %s53, %s56
    %p62 = scmp.eq.s32.totalorder %s8, 0
    %p63 = por %p61, %p62
    %p64 = scmp.ne.s32.totalorder %s53, %s56
    %p65 = scmp.eq.s32.totalorder %s13, 1
    %p66 = por %p64, %p65
    %p67 = scmp.ne.s32.totalorder %s56, %s57
    %p68 = scmp.eq.s32.totalorder %s13, 0
    %p69 = por %p67, %p68
    %p70 = scmp.ne.s32.totalorder %s56, %s57
    %p71 = scmp.eq.s32.totalorder %s14, 1
    %p72 = por %p70, %p71
    %p74 = scmp.ne.s32.totalorder %s57, %s73
    %p75 = scmp.eq.s32.totalorder %s14, 0
    %p76 = por %p74, %p75
    %s77 = ssub.s32 %s15, %s27
    %s78 = ssub.s32 %s16, %s23
    %s79 = sor.u32 %s77, %s78
    %p80 = scmp.eq.s32.totalorder %s79, 0
    %s82 = sadd.s32 %s81, 1
    %s83 = scalar_select %p80, %s81, %s82
    %p86 = pneg %p80
    %p87 = scmp.eq.s32.totalorder %s8, 1
    %p88 = por %p86, %p87
    %p89 = scmp.ne.s32.totalorder %s81, %s84
    %p90 = scmp.eq.s32.totalorder %s8, 0
    %p91 = por %p89, %p90
    %p92 = scmp.ne.s32.totalorder %s81, %s84
    %p93 = scmp.eq.s32.totalorder %s13, 1
    %p94 = por %p92, %p93
    %p95 = scmp.ne.s32.totalorder %s84, %s85
    %p96 = scmp.eq.s32.totalorder %s13, 0
    %p97 = por %p95, %p96
    %p98 = scmp.ne.s32.totalorder %s84, %s85
    %p99 = scmp.eq.s32.totalorder %s14, 1
    %p100 = por %p98, %p99
    %p102 = scmp.ne.s32.totalorder %s85, %s101
    %p103 = scmp.eq.s32.totalorder %s14, 0
    %p104 = por %p102, %p103
    %p105 = scmp.le.s32.totalorder 1, %s8
    %p106 = scmp.lt.s32.totalorder %s8, 3
    %p107 = pnand %p105, %p106
    %p108 = pneg %p107
    // Predicated region
    $region9: #{tpu_custom_call.1} parent=5 // pred_check
      _
    $region10: #{tpu_custom_call.1} parent=5 // pred_check_branch
      %110 = sbr.rel (%p107) target = $region12
    $region11: #{tpu_custom_call.1} parent=5 // pred_region
      %s111 = ssub.s32 %s8, 1
      // Predicated region
      $region13: #{tpu_custom_call.1} parent=11 // pred_check
        %p112 = pneg %p41
      $region14: #{tpu_custom_call.1} parent=11 // pred_check_branch
        %114 = sbr.rel (%p112) target = $region16
      $region15: #{tpu_custom_call.1} parent=11 // pred_region
        _
      $region16: #{tpu_custom_call.1} parent=11 // pred_fallthru
        _
    $region12: #{tpu_custom_call.1} parent=5 // pred_fallthru
      _
    %p115 = scmp.lt.s32.totalorder %s8, 2
    // Predicated region
    $region17: #{tpu_custom_call.1} parent=5 // pred_check
      %p116 = pneg %p115
    $region18: #{tpu_custom_call.1} parent=5 // pred_check_branch
      %118 = sbr.rel (%p116) target = $region20
    $region19: #{tpu_custom_call.1} parent=5 // pred_region
      // Predicated region
      $region21: #{tpu_custom_call.1} parent=19 // pred_check
        %p119 = pneg %p63
      $region22: #{tpu_custom_call.1} parent=19 // pred_check_branch
        %121 = sbr.rel (%p119) target = $region24
      $region23: #{tpu_custom_call.1} parent=19 // pred_region
        %p122 = scmp.lt.s32.totalorder %s15, 1
        %s123 = scalar_select %p122, %s15, 1
        %p124 = scmp.lt.s32.totalorder %s16, 0
        %s125 = scalar_select %p124, %s16, 0
        %s126 = smul.addr %s123, 2
        %s127 = sadd.s32 %s125, %s126
        %s128 = smul.addr %s127, 8
        %s129 = scalar_lea.vmem %s1, %s128
      $region24: #{tpu_custom_call.1} parent=19 // pred_fallthru
        _
    $region20: #{tpu_custom_call.1} parent=5 // pred_fallthru
      _
    %p130 = scmp.le.s32.totalorder 1, %s8
    %p131 = scmp.lt.s32.totalorder %s8, 3
    %p132 = pnand %p130, %p131
    %p133 = pneg %p132
    // Predicated region
    $region25: #{tpu_custom_call.1} parent=5 // pred_check
      _
    $region26: #{tpu_custom_call.1} parent=5 // pred_check_branch
      %135 = sbr.rel (%p132) target = $region28
    $region27: #{tpu_custom_call.1} parent=5 // pred_region
      %s136 = ssub.s32 %s8, 1
      %p137 = pneg %p41
      %p138 = pneg %p38
      %p139 = scmp.lt.s32.totalorder %s17, 1
      %s140 = scalar_select %p139, %s17, 1
      %p141 = scmp.lt.s32.totalorder %s18, 0
      %s142 = scalar_select %p141, %s18, 0
      %s143 = smul.addr %s140, 2
      %s144 = sadd.s32 %s142, %s143
      %s145 = smul.addr %s144, 8
      %s146 = scalar_lea.vmem %s1, %s145
      %p147 = pneg %p69
      %p148 = pneg %p66
      %p149 = pneg %p97
      %p150 = pneg %p94
      %p151 = scmp.lt.s32.totalorder %s17, 1
      %s152 = scalar_select %p151, %s17, 1
      %p153 = scmp.lt.s32.totalorder %s18, 0
      %s154 = scalar_select %p153, %s18, 0
      %s155 = smul.addr %s152, 2
      %s156 = sadd.s32 %s154, %s155
      %s157 = smul.addr %s156, 8
      %s158 = scalar_lea.vmem %s2, %s157
      %p159 = scmp.lt.s32.totalorder %s17, 1
      %s160 = scalar_select %p159, %s17, 1
      %p161 = scmp.lt.s32.totalorder %s18, 0
      %s162 = scalar_select %p161, %s18, 0
      %s163 = smul.addr %s160, 2
      %s164 = sadd.s32 %s162, %s163
      %s165 = smul.addr %s164, 8
      %s166 = scalar_lea.vmem %s1, %s165
      %p167 = scmp.lt.s32.totalorder %s17, 1
      %s168 = scalar_select %p167, %s17, 1
      %p169 = scmp.lt.s32.totalorder %s18, 0
      %s170 = scalar_select %p169, %s18, 0
      %s171 = smul.addr %s168, 2
      %s172 = sadd.s32 %s170, %s171
      %s173 = smul.addr %s172, 8
      %s174 = scalar_lea.vmem %s2, %s173
      %v175 = vld [vmem:[%s166] sm:$0xff]
      %v176 = vld [vmem:[%s166 + $0x8] sm:$0xff]
      %vm177 = vcmask 64512
      %v178 = vsel %vm177, %v175, 0.0
      %v179 = vsel %vm177, %v176, 0.0
      %v180 = vld [vmem:[%s0] sm:$0xff]
      %v181 = vld [vmem:[%s0 + $0x8] sm:$0xff]
      %vm182 = vcmask 130048
      %v184 = vsel %vm182, %v180, 0
      %v187 = vsel %vm182, %v181, 0
      %189 = vmatprep.subr.mxu0 0.0
      %v190 = vand.u32 %v178, 4294901760
      %191 = vmatpush1.msra.mxu0 %v190
      %192 = vmatprep.subr.mxu0 0.0
      %v193 = vand.u32 %v179, 4294901760
      %194 = vmatpush1.msra.mxu0 %v193
      %195 = vmatprep.subr.mxu0 0.0
      %196 = vmatpush1.msra.mxu0 0.0
      %197 = vmatprep.subr.mxu0 0.0
      %198 = vmatpush1.msra.mxu0 0.0
      %199 = vmatprep.subr.mxu0 0.0
      %200 = vmatpush1.msra.mxu0 0.0
      %201 = vmatprep.subr.mxu0 0.0
      %202 = vmatpush1.msra.mxu0 0.0
      %203 = vmatprep.subr.mxu0 0.0
      %204 = vmatpush1.msra.mxu0 0.0
      %205 = vmatprep.subr.mxu0 0.0
      %206 = vmatpush1.msra.mxu0 0.0
      %207 = vmatprep.subr.mxu0 0.0
      %208 = vmatpush1.msra.mxu0 0.0
      %209 = vmatprep.subr.mxu0 0.0
      %210 = vmatpush1.msra.mxu0 0.0
      %211 = vmatprep.subr.mxu0 0.0
      %212 = vmatpush1.msra.mxu0 0.0
      %213 = vmatprep.subr.mxu0 0.0
      %214 = vmatpush1.msra.mxu0 0.0
      %215 = vmatprep.subr.mxu0 0.0
      %216 = vmatpush1.msra.mxu0 0.0
      %217 = vmatprep.subr.mxu0 0.0
      %218 = vmatpush1.msra.mxu0 0.0
      %219 = vmatprep.subr.mxu0 0.0
      %220 = vmatpush1.msra.mxu0 0.0
      %221 = vmatprep.subr.mxu0 0.0
      %222 = vmatpush1.msra.mxu0 0.0
      %223 = vmatprep.subr.mxu0 0.0
      %224 = vmatpush1.msra.mxu0 0.0
      %225 = vmatprep.subr.mxu0 0.0
      %226 = vmatpush1.msra.mxu0 0.0
      %227 = vmatprep.subr.mxu0 0.0
      %228 = vmatpush1.msra.mxu0 0.0
      %229 = vmatprep.subr.mxu0 0.0
      %230 = vmatpush1.msra.mxu0 0.0
      %231 = vmatprep.subr.mxu0 0.0
      %232 = vmatpush1.msra.mxu0 0.0
      %233 = vmatprep.subr.mxu0 0.0
      %234 = vmatpush1.msra.mxu0 0.0
      %235 = vmatprep.subr.mxu0 0.0
      %236 = vmatpush1.msra.mxu0 0.0
      %237 = vmatprep.subr.mxu0 0.0
      %238 = vmatpush1.msra.mxu0 0.0
      %239 = vmatprep.subr.mxu0 0.0
      %240 = vmatpush1.msra.mxu0 0.0
      %241 = vmatprep.subr.mxu0 0.0
      %242 = vmatpush1.msra.mxu0 0.0
      %243 = vmatprep.subr.mxu0 0.0
      %244 = vmatpush1.msra.mxu0 0.0
      %245 = vmatprep.subr.mxu0 0.0
      %246 = vmatpush1.msra.mxu0 0.0
      %247 = vmatprep.subr.mxu0 0.0
      %248 = vmatpush1.msra.mxu0 0.0
      %249 = vmatprep.subr.mxu0 0.0
      %250 = vmatpush1.msra.mxu0 0.0
      %251 = vmatprep.subr.mxu0 0.0
      %252 = vmatpush1.msra.mxu0 0.0
      %253 = vmatprep.subr.mxu0 0.0
      %254 = vmatpush1.msra.mxu0 0.0
      %255 = vmatprep.mubr.f32.mxu0 0.0
      %v256 = vand.u32 %v184, 4294901760
      %v257 = vsub.f32 %v184, %v256
      %v258 = vand.u32 %v257, 4294901760
      %v259 = vsub.f32 %v257, %v258
      %v260 = vand.u32 %v259, 4294901760
      %261 = vmatmul.mubr.f32.gmra.mrb[0].mxu0 %v260
      %v262 = vpop.f32.mrb[0].mxu0
      %v263 = vadd.f32 0.0, %v262
      %v264 = vpop.f32.mrb[0].mxu0
      %265 = vmatprep.mubr.f32.mxu0 0.0
      %v266 = vand.u32 %v187, 4294901760
      %v267 = vsub.f32 %v187, %v266
      %v268 = vand.u32 %v267, 4294901760
      %v269 = vsub.f32 %v267, %v268
      %v270 = vand.u32 %v269, 4294901760
      %271 = vmatmul.mubr.f32.gmra.mrb[0].mxu0 %v270
      %v272 = vpop.f32.mrb[0].mxu0
      %v273 = vadd.f32 0.0, %v272
      %v274 = vpop.f32.mrb[0].mxu0
      %275 = vdwg.mxu0
      %276 = vmatprep.subr.mxu0 0.0
      %v277 = vand.u32 %v178, 4294901760
      %v278 = vsub.f32 %v178, %v277
      %v279 = vand.u32 %v278, 4294901760
      %v280 = vsub.f32 %v278, %v279
      %v281 = vand.u32 %v280, 4294901760
      %282 = vmatpush1.msra.mxu0 %v281
      %283 = vmatprep.subr.mxu0 0.0
      %v284 = vand.u32 %v179, 4294901760
      %v285 = vsub.f32 %v179, %v284
      %v286 = vand.u32 %v285, 4294901760
      %v287 = vsub.f32 %v285, %v286
      %v288 = vand.u32 %v287, 4294901760
      %289 = vmatpush1.msra.mxu0 %v288
      %290 = vmatprep.subr.mxu0 0.0
      %291 = vmatpush1.msra.mxu0 0.0
      %292 = vmatprep.subr.mxu0 0.0
      %293 = vmatpush1.msra.mxu0 0.0
      %294 = vmatprep.subr.mxu0 0.0
      %295 = vmatpush1.msra.mxu0 0.0
      %296 = vmatprep.subr.mxu0 0.0
      %297 = vmatpush1.msra.mxu0 0.0
      %298 = vmatprep.subr.mxu0 0.0
      %299 = vmatpush1.msra.mxu0 0.0
      %300 = vmatprep.subr.mxu0 0.0
      %301 = vmatpush1.msra.mxu0 0.0
      %302 = vmatprep.subr.mxu0 0.0
      %303 = vmatpush1.msra.mxu0 0.0
      %304 = vmatprep.subr.mxu0 0.0
      %305 = vmatpush1.msra.mxu0 0.0
      %306 = vmatprep.subr.mxu0 0.0
      %307 = vmatpush1.msra.mxu0 0.0
      %308 = vmatprep.subr.mxu0 0.0
      %309 = vmatpush1.msra.mxu0 0.0
      %310 = vmatprep.subr.mxu0 0.0
      %311 = vmatpush1.msra.mxu0 0.0
      %312 = vmatprep.subr.mxu0 0.0
      %313 = vmatpush1.msra.mxu0 0.0
      %314 = vmatprep.subr.mxu0 0.0
      %315 = vmatpush1.msra.mxu0 0.0
      %316 = vmatprep.subr.mxu0 0.0
      %317 = vmatpush1.msra.mxu0 0.0
      %318 = vmatprep.subr.mxu0 0.0
      %319 = vmatpush1.msra.mxu0 0.0
      %320 = vmatprep.subr.mxu0 0.0
      %321 = vmatpush1.msra.mxu0 0.0
      %322 = vmatprep.subr.mxu0 0.0
      %323 = vmatpush1.msra.mxu0 0.0
      %324 = vmatprep.subr.mxu0 0.0
      %325 = vmatpush1.msra.mxu0 0.0
      %326 = vmatprep.subr.mxu0 0.0
      %327 = vmatpush1.msra.mxu0 0.0
      %328 = vmatprep.subr.mxu0 0.0
      %329 = vmatpush1.msra.mxu0 0.0
      %330 = vmatprep.subr.mxu0 0.0
      %331 = vmatpush1.msra.mxu0 0.0
      %332 = vmatprep.subr.mxu0 0.0
      %333 = vmatpush1.msra.mxu0 0.0
      %334 = vmatprep.subr.mxu0 0.0
      %335 = vmatpush1.msra.mxu0 0.0
      %336 = vmatprep.subr.mxu0 0.0
      %337 = vmatpush1.msra.mxu0 0.0
      %338 = vmatprep.subr.mxu0 0.0
      %339 = vmatpush1.msra.mxu0 0.0
      %340 = vmatprep.subr.mxu0 0.0
      %341 = vmatpush1.msra.mxu0 0.0
      %342 = vmatprep.subr.mxu0 0.0
      %343 = vmatpush1.msra.mxu0 0.0
      %344 = vmatprep.subr.mxu0 0.0
      %345 = vmatpush1.msra.mxu0 0.0
      %346 = vmatprep.subr.mxu0 0.0
      %347 = vmatpush1.msra.mxu0 0.0
      %348 = vmatprep.subr.mxu0 0.0
      %349 = vmatpush1.msra.mxu0 0.0
      %350 = vmatprep.mubr.f32.mxu0 0.0
      %v351 = vand.u32 %v184, 4294901760
      %352 = vmatmul.mubr.f32.gmra.mrb[0].mxu0 %v351
      %v353 = vpop.f32.mrb[0].mxu0
      %v354 = vadd.f32 %v263, %v353
      %v355 = vpop.f32.mrb[0].mxu0
      %356 = vmatprep.mubr.f32.mxu0 0.0
      %v357 = vand.u32 %v187, 4294901760
      %358 = vmatmul.mubr.f32.gmra.mrb[0].mxu0 %v357
      %v359 = vpop.f32.mrb[0].mxu0
      %v360 = vadd.f32 %v273, %v359
      %v361 = vpop.f32.mrb[0].mxu0
      %362 = vdwg.mxu0
      %363 = vmatprep.subr.mxu0 0.0
      %v364 = vand.u32 %v178, 4294901760
      %v365 = vsub.f32 %v178, %v364
      %366 = vmatpush1.msra.mxu0 %v365
      %367 = vmatprep.subr.mxu0 0.0
      %v368 = vand.u32 %v179, 4294901760
      %v369 = vsub.f32 %v179, %v368
      %370 = vmatpush1.msra.mxu0 %v369
      %371 = vmatprep.subr.mxu0 0.0
      %372 = vmatpush1.msra.mxu0 0.0
      %373 = vmatprep.subr.mxu0 0.0
      %374 = vmatpush1.msra.mxu0 0.0
      %375 = vmatprep.subr.mxu0 0.0
      %376 = vmatpush1.msra.mxu0 0.0
      %377 = vmatprep.subr.mxu0 0.0
      %378 = vmatpush1.msra.mxu0 0.0
      %379 = vmatprep.subr.mxu0 0.0
      %380 = vmatpush1.msra.mxu0 0.0
      %381 = vmatprep.subr.mxu0 0.0
      %382 = vmatpush1.msra.mxu0 0.0
      %383 = vmatprep.subr.mxu0 0.0
      %384 = vmatpush1.msra.mxu0 0.0
      %385 = vmatprep.subr.mxu0 0.0
      %386 = vmatpush1.msra.mxu0 0.0
      %387 = vmatprep.subr.mxu0 0.0
      %388 = vmatpush1.msra.mxu0 0.0
      %389 = vmatprep.subr.mxu0 0.0
      %390 = vmatpush1.msra.mxu0 0.0
      %391 = vmatprep.subr.mxu0 0.0
      %392 = vmatpush1.msra.mxu0 0.0
      %393 = vmatprep.subr.mxu0 0.0
      %394 = vmatpush1.msra.mxu0 0.0
      %395 = vmatprep.subr.mxu0 0.0
      %396 = vmatpush1.msra.mxu0 0.0
      %397 = vmatprep.subr.mxu0 0.0
      %398 = vmatpush1.msra.mxu0 0.0
      %399 = vmatprep.subr.mxu0 0.0
      %400 = vmatpush1.msra.mxu0 0.0
      %401 = vmatprep.subr.mxu0 0.0
      %402 = vmatpush1.msra.mxu0 0.0
      %403 = vmatprep.subr.mxu0 0.0
      %404 = vmatpush1.msra.mxu0 0.0
      %405 = vmatprep.subr.mxu0 0.0
      %406 = vmatpush1.msra.mxu0 0.0
      %407 = vmatprep.subr.mxu0 0.0
      %408 = vmatpush1.msra.mxu0 0.0
      %409 = vmatprep.subr.mxu0 0.0
      %410 = vmatpush1.msra.mxu0 0.0
      %411 = vmatprep.subr.mxu0 0.0
      %412 = vmatpush1.msra.mxu0 0.0
      %413 = vmatprep.subr.mxu0 0.0
      %414 = vmatpush1.msra.mxu0 0.0
      %415 = vmatprep.subr.mxu0 0.0
      %416 = vmatpush1.msra.mxu0 0.0
      %417 = vmatprep.subr.mxu0 0.0
      %418 = vmatpush1.msra.mxu0 0.0
      %419 = vmatprep.subr.mxu0 0.0
      %420 = vmatpush1.msra.mxu0 0.0
      %421 = vmatprep.subr.mxu0 0.0
      %422 = vmatpush1.msra.mxu0 0.0
      %423 = vmatprep.subr.mxu0 0.0
      %424 = vmatpush1.msra.mxu0 0.0
      %425 = vmatprep.subr.mxu0 0.0
      %426 = vmatpush1.msra.mxu0 0.0
      %427 = vmatprep.subr.mxu0 0.0
      %428 = vmatpush1.msra.mxu0 0.0
      %429 = vmatprep.subr.mxu0 0.0
      %430 = vmatpush1.msra.mxu0 0.0
      %431 = vmatprep.mubr.f32.mxu0 0.0
      %v432 = vand.u32 %v184, 4294901760
      %v433 = vsub.f32 %v184, %v432
      %434 = vmatmul.mubr.f32.gmra.mrb[0].mxu0 %v433
      %v435 = vpop.f32.mrb[0].mxu0
      %v436 = vadd.f32 %v354, %v435
      %v437 = vpop.f32.mrb[0].mxu0
      %438 = vmatprep.mubr.f32.mxu0 0.0
      %v439 = vand.u32 %v187, 4294901760
      %v440 = vsub.f32 %v187, %v439
      %441 = vmatmul.mubr.f32.gmra.mrb[0].mxu0 %v440
      %v442 = vpop.f32.mrb[0].mxu0
      %v443 = vadd.f32 %v360, %v442
      %v444 = vpop.f32.mrb[0].mxu0
      %445 = vdwg.mxu0
      %446 = vmatprep.subr.mxu0 0.0
      %v447 = vand.u32 %v178, 4294901760
      %448 = vmatpush1.msra.mxu0 %v447
      %449 = vmatprep.subr.mxu0 0.0
      %v450 = vand.u32 %v179, 4294901760
      %451 = vmatpush1.msra.mxu0 %v450
      %452 = vmatprep.subr.mxu0 0.0
      %453 = vmatpush1.msra.mxu0 0.0
      %454 = vmatprep.subr.mxu0 0.0
      %455 = vmatpush1.msra.mxu0 0.0
      %456 = vmatprep.subr.mxu0 0.0
      %457 = vmatpush1.msra.mxu0 0.0
      %458 = vmatprep.subr.mxu0 0.0
      %459 = vmatpush1.msra.mxu0 0.0
      %460 = vmatprep.subr.mxu0 0.0
      %461 = vmatpush1.msra.mxu0 0.0
      %462 = vmatprep.subr.mxu0 0.0
      %463 = vmatpush1.msra.mxu0 0.0
      %464 = vmatprep.subr.mxu0 0.0
      %465 = vmatpush1.msra.mxu0 0.0
      %466 = vmatprep.subr.mxu0 0.0
      %467 = vmatpush1.msra.mxu0 0.0
      %468 = vmatprep.subr.mxu0 0.0
      %469 = vmatpush1.msra.mxu0 0.0
      %470 = vmatprep.subr.mxu0 0.0
      %471 = vmatpush1.msra.mxu0 0.0
      %472 = vmatprep.subr.mxu0 0.0
      %473 = vmatpush1.msra.mxu0 0.0
      %474 = vmatprep.subr.mxu0 0.0
      %475 = vmatpush1.msra.mxu0 0.0
      %476 = vmatprep.subr.mxu0 0.0
      %477 = vmatpush1.msra.mxu0 0.0
      %478 = vmatprep.subr.mxu0 0.0
      %479 = vmatpush1.msra.mxu0 0.0
      %480 = vmatprep.subr.mxu0 0.0
      %481 = vmatpush1.msra.mxu0 0.0
      %482 = vmatprep.subr.mxu0 0.0
      %483 = vmatpush1.msra.mxu0 0.0
      %484 = vmatprep.subr.mxu0 0.0
      %485 = vmatpush1.msra.mxu0 0.0
      %486 = vmatprep.subr.mxu0 0.0
      %487 = vmatpush1.msra.mxu0 0.0
      %488 = vmatprep.subr.mxu0 0.0
      %489 = vmatpush1.msra.mxu0 0.0
      %490 = vmatprep.subr.mxu0 0.0
      %491 = vmatpush1.msra.mxu0 0.0
      %492 = vmatprep.subr.mxu0 0.0
      %493 = vmatpush1.msra.mxu0 0.0
      %494 = vmatprep.subr.mxu0 0.0
      %495 = vmatpush1.msra.mxu0 0.0
      %496 = vmatprep.subr.mxu0 0.0
      %497 = vmatpush1.msra.mxu0 0.0
      %498 = vmatprep.subr.mxu0 0.0
      %499 = vmatpush1.msra.mxu0 0.0
      %500 = vmatprep.subr.mxu0 0.0
      %501 = vmatpush1.msra.mxu0 0.0
      %502 = vmatprep.subr.mxu0 0.0
      %503 = vmatpush1.msra.mxu0 0.0
      %504 = vmatprep.subr.mxu0 0.0
      %505 = vmatpush1.msra.mxu0 0.0
      %506 = vmatprep.subr.mxu0 0.0
      %507 = vmatpush1.msra.mxu0 0.0
      %508 = vmatprep.subr.mxu0 0.0
      %509 = vmatpush1.msra.mxu0 0.0
      %510 = vmatprep.subr.mxu0 0.0
      %511 = vmatpush1.msra.mxu0 0.0
      %512 = vmatprep.mubr.f32.mxu0 0.0
      %v513 = vand.u32 %v184, 4294901760
      %v514 = vsub.f32 %v184, %v513
      %v515 = vand.u32 %v514, 4294901760
      %516 = vmatmul.mubr.f32.gmra.mrb[0].mxu0 %v515
      %v517 = vpop.f32.mrb[0].mxu0
      %v518 = vadd.f32 %v436, %v517
      %v519 = vpop.f32.mrb[0].mxu0
      %520 = vmatprep.mubr.f32.mxu0 0.0
      %v521 = vand.u32 %v187, 4294901760
      %v522 = vsub.f32 %v187, %v521
      %v523 = vand.u32 %v522, 4294901760
      %524 = vmatmul.mubr.f32.gmra.mrb[0].mxu0 %v523
      %v525 = vpop.f32.mrb[0].mxu0
      %v526 = vadd.f32 %v443, %v525
      %v527 = vpop.f32.mrb[0].mxu0
      %528 = vdwg.mxu0
      %529 = vmatprep.subr.mxu0 0.0
      %v530 = vand.u32 %v178, 4294901760
      %v531 = vsub.f32 %v178, %v530
      %v532 = vand.u32 %v531, 4294901760
      %533 = vmatpush1.msra.mxu0 %v532
      %534 = vmatprep.subr.mxu0 0.0
      %v535 = vand.u32 %v179, 4294901760
      %v536 = vsub.f32 %v179, %v535
      %v537 = vand.u32 %v536, 4294901760
      %538 = vmatpush1.msra.mxu0 %v537
      %539 = vmatprep.subr.mxu0 0.0
      %540 = vmatpush1.msra.mxu0 0.0
      %541 = vmatprep.subr.mxu0 0.0
      %542 = vmatpush1.msra.mxu0 0.0
      %543 = vmatprep.subr.mxu0 0.0
      %544 = vmatpush1.msra.mxu0 0.0
      %545 = vmatprep.subr.mxu0 0.0
      %546 = vmatpush1.msra.mxu0 0.0
      %547 = vmatprep.subr.mxu0 0.0
      %548 = vmatpush1.msra.mxu0 0.0
      %549 = vmatprep.subr.mxu0 0.0
      %550 = vmatpush1.msra.mxu0 0.0
      %551 = vmatprep.subr.mxu0 0.0
      %552 = vmatpush1.msra.mxu0 0.0
      %553 = vmatprep.subr.mxu0 0.0
      %554 = vmatpush1.msra.mxu0 0.0
      %555 = vmatprep.subr.mxu0 0.0
      %556 = vmatpush1.msra.mxu0 0.0
      %557 = vmatprep.subr.mxu0 0.0
      %558 = vmatpush1.msra.mxu0 0.0
      %559 = vmatprep.subr.mxu0 0.0
      %560 = vmatpush1.msra.mxu0 0.0
      %561 = vmatprep.subr.mxu0 0.0
      %562 = vmatpush1.msra.mxu0 0.0
      %563 = vmatprep.subr.mxu0 0.0
      %564 = vmatpush1.msra.mxu0 0.0
      %565 = vmatprep.subr.mxu0 0.0
      %566 = vmatpush1.msra.mxu0 0.0
      %567 = vmatprep.subr.mxu0 0.0
      %568 = vmatpush1.msra.mxu0 0.0
      %569 = vmatprep.subr.mxu0 0.0
      %570 = vmatpush1.msra.mxu0 0.0
      %571 = vmatprep.subr.mxu0 0.0
      %572 = vmatpush1.msra.mxu0 0.0
      %573 = vmatprep.subr.mxu0 0.0
      %574 = vmatpush1.msra.mxu0 0.0
      %575 = vmatprep.subr.mxu0 0.0
      %576 = vmatpush1.msra.mxu0 0.0
      %577 = vmatprep.subr.mxu0 0.0
      %578 = vmatpush1.msra.mxu0 0.0
      %579 = vmatprep.subr.mxu0 0.0
      %580 = vmatpush1.msra.mxu0 0.0
      %581 = vmatprep.subr.mxu0 0.0
      %582 = vmatpush1.msra.mxu0 0.0
      %583 = vmatprep.subr.mxu0 0.0
      %584 = vmatpush1.msra.mxu0 0.0
      %585 = vmatprep.subr.mxu0 0.0
      %586 = vmatpush1.msra.mxu0 0.0
      %587 = vmatprep.subr.mxu0 0.0
      %588 = vmatpush1.msra.mxu0 0.0
      %589 = vmatprep.subr.mxu0 0.0
      %590 = vmatpush1.msra.mxu0 0.0
      %591 = vmatprep.subr.mxu0 0.0
      %592 = vmatpush1.msra.mxu0 0.0
      %593 = vmatprep.subr.mxu0 0.0
      %594 = vmatpush1.msra.mxu0 0.0
      %595 = vmatprep.subr.mxu0 0.0
      %596 = vmatpush1.msra.mxu0 0.0
      %597 = vmatprep.subr.mxu0 0.0
      %598 = vmatpush1.msra.mxu0 0.0
      %599 = vmatprep.mubr.f32.mxu0 0.0
      %v600 = vand.u32 %v184, 4294901760
      %601 = vmatmul.mubr.f32.gmra.mrb[0].mxu0 %v600
      %v602 = vpop.f32.mrb[0].mxu0
      %v603 = vadd.f32 %v518, %v602
      %v604 = vpop.f32.mrb[0].mxu0
      %605 = vmatprep.mubr.f32.mxu0 0.0
      %v606 = vand.u32 %v187, 4294901760
      %607 = vmatmul.mubr.f32.gmra.mrb[0].mxu0 %v606
      %v608 = vpop.f32.mrb[0].mxu0
      %v609 = vadd.f32 %v526, %v608
      %v610 = vpop.f32.mrb[0].mxu0
      %611 = vdwg.mxu0
      %612 = vmatprep.subr.mxu0 0.0
      %v613 = vand.u32 %v178, 4294901760
      %614 = vmatpush1.msra.mxu0 %v613
      %615 = vmatprep.subr.mxu0 0.0
      %v616 = vand.u32 %v179, 4294901760
      %617 = vmatpush1.msra.mxu0 %v616
      %618 = vmatprep.subr.mxu0 0.0
      %619 = vmatpush1.msra.mxu0 0.0
      %620 = vmatprep.subr.mxu0 0.0
      %621 = vmatpush1.msra.mxu0 0.0
      %622 = vmatprep.subr.mxu0 0.0
      %623 = vmatpush1.msra.mxu0 0.0
      %624 = vmatprep.subr.mxu0 0.0
      %625 = vmatpush1.msra.mxu0 0.0
      %626 = vmatprep.subr.mxu0 0.0
      %627 = vmatpush1.msra.mxu0 0.0
      %628 = vmatprep.subr.mxu0 0.0
      %629 = vmatpush1.msra.mxu0 0.0
      %630 = vmatprep.subr.mxu0 0.0
      %631 = vmatpush1.msra.mxu0 0.0
      %632 = vmatprep.subr.mxu0 0.0
      %633 = vmatpush1.msra.mxu0 0.0
      %634 = vmatprep.subr.mxu0 0.0
      %635 = vmatpush1.msra.mxu0 0.0
      %636 = vmatprep.subr.mxu0 0.0
      %637 = vmatpush1.msra.mxu0 0.0
      %638 = vmatprep.subr.mxu0 0.0
      %639 = vmatpush1.msra.mxu0 0.0
      %640 = vmatprep.subr.mxu0 0.0
      %641 = vmatpush1.msra.mxu0 0.0
      %642 = vmatprep.subr.mxu0 0.0
      %643 = vmatpush1.msra.mxu0 0.0
      %644 = vmatprep.subr.mxu0 0.0
      %645 = vmatpush1.msra.mxu0 0.0
      %646 = vmatprep.subr.mxu0 0.0
      %647 = vmatpush1.msra.mxu0 0.0
      %648 = vmatprep.subr.mxu0 0.0
      %649 = vmatpush1.msra.mxu0 0.0
      %650 = vmatprep.subr.mxu0 0.0
      %651 = vmatpush1.msra.mxu0 0.0
      %652 = vmatprep.subr.mxu0 0.0
      %653 = vmatpush1.msra.mxu0 0.0
      %654 = vmatprep.subr.mxu0 0.0
      %655 = vmatpush1.msra.mxu0 0.0
      %656 = vmatprep.subr.mxu0 0.0
      %657 = vmatpush1.msra.mxu0 0.0
      %658 = vmatprep.subr.mxu0 0.0
      %659 = vmatpush1.msra.mxu0 0.0
      %660 = vmatprep.subr.mxu0 0.0
      %661 = vmatpush1.msra.mxu0 0.0
      %662 = vmatprep.subr.mxu0 0.0
      %663 = vmatpush1.msra.mxu0 0.0
      %664 = vmatprep.subr.mxu0 0.0
      %665 = vmatpush1.msra.mxu0 0.0
      %666 = vmatprep.subr.mxu0 0.0
      %667 = vmatpush1.msra.mxu0 0.0
      %668 = vmatprep.subr.mxu0 0.0
      %669 = vmatpush1.msra.mxu0 0.0
      %670 = vmatprep.subr.mxu0 0.0
      %671 = vmatpush1.msra.mxu0 0.0
      %672 = vmatprep.subr.mxu0 0.0
      %673 = vmatpush1.msra.mxu0 0.0
      %674 = vmatprep.subr.mxu0 0.0
      %675 = vmatpush1.msra.mxu0 0.0
      %676 = vmatprep.subr.mxu0 0.0
      %677 = vmatpush1.msra.mxu0 0.0
      %678 = vmatprep.mubr.f32.mxu0 0.0
      %v679 = vand.u32 %v184, 4294901760
      %680 = vmatmul.mubr.f32.gmra.mrb[0].mxu0 %v679
      %v681 = vpop.f32.mrb[0].mxu0
      %v682 = vadd.f32 %v603, %v681
      %v683 = vpop.f32.mrb[0].mxu0
      %684 = vmatprep.mubr.f32.mxu0 0.0
      %v685 = vand.u32 %v187, 4294901760
      %686 = vmatmul.mubr.f32.gmra.mrb[0].mxu0 %v685
      %v687 = vpop.f32.mrb[0].mxu0
      %v688 = vadd.f32 %v609, %v687
      %v689 = vpop.f32.mrb[0].mxu0
      %690 = vdwg.mxu0
      %691 = vst.msk [vmem:[%s174] sm:$0xff] %vm177, %v682
      %692 = vst.msk [vmem:[%s174 + $0x8] sm:$0xff] %vm177, %v688
      %p693 = scmp.lt.s32.totalorder %s17, 1
      %s694 = scalar_select %p693, %s17, 1
      %p695 = scmp.lt.s32.totalorder %s18, 0
      %s696 = scalar_select %p695, %s18, 0
      %s697 = smul.addr %s694, 2
      %s698 = sadd.s32 %s696, %s697
      %s699 = smul.addr %s698, 8
      %s700 = scalar_lea.vmem %s2, %s699
      // Predicated region
      $region29: #{tpu_custom_call.1} parent=27 // pred_check
        %p701 = pneg %p94
      $region30: #{tpu_custom_call.1} parent=27 // pred_check_branch
        %703 = sbr.rel (%p701) target = $region32
      $region31: #{tpu_custom_call.1} parent=27 // pred_region
        _
      $region32: #{tpu_custom_call.1} parent=27 // pred_fallthru
        _
    $region28: #{tpu_custom_call.1} parent=5 // pred_fallthru
      _
    %p704 = scmp.le.s32.totalorder 2, %s8
    // Predicated region
    $region33: #{tpu_custom_call.1} parent=5 // pred_check
      %p705 = pneg %p704
    $region34: #{tpu_custom_call.1} parent=5 // pred_check_branch
      %707 = sbr.rel (%p705) target = $region36
    $region35: #{tpu_custom_call.1} parent=5 // pred_region
      %s708 = ssub.s32 %s8, 2
      // Predicated region
      $region37: #{tpu_custom_call.1} parent=35 // pred_check
        %p709 = pneg %p100
      $region38: #{tpu_custom_call.1} parent=35 // pred_check_branch
        %711 = sbr.rel (%p709) target = $region40
      $region39: #{tpu_custom_call.1} parent=35 // pred_region
        %p712 = scmp.lt.s32.totalorder %s19, 1
        %s713 = scalar_select %p712, %s19, 1
        %p714 = scmp.lt.s32.totalorder %s20, 0
        %s715 = scalar_select %p714, %s20, 0
        %s716 = smul.addr %s713, 2
        %s717 = sadd.s32 %s715, %s716
        %s718 = smul.addr %s717, 8
        %s719 = scalar_lea.vmem %s2, %s718
      $region40: #{tpu_custom_call.1} parent=35 // pred_fallthru
        _
    $region36: #{tpu_custom_call.1} parent=5 // pred_fallthru
      _
  $region6: #{tpu_custom_call.1} parent=0 // loop_footer
    %s12 = sadd.s32 1, %s8
  $region7: #{tpu_custom_call.1} parent=0 // loop_footer_branch
    %7 = sbr.rel target = $region3
  $region8: #{tpu_custom_call.1} parent=0 // loop_exit
    _

</llo_original>
